<compile_context>
chip_gen: v7x
topology: tpu7x:2x2x1
jax: 0.10.0
libtpu: 0.0.40
codegen_flags: <defaults>
</compile_context>

<pallas_src>
import functools

import jax
import jax.numpy as jnp
from jax.experimental import pallas as pl
from jax.experimental.pallas import tpu as pltpu

_LANE = 128
_NEG = -1e30  # finite "-inf" for masked padded lanes


def _round_up(x, m):
    return ((x + m - 1) // m) * m


def _fused_sa_kernel(s_ref, a_ref, w_ref, b_ref, out_ref, *, n_state, n_action):
    """Both concept-net heads: MLP -> masked softmax & log-softmax.

    s_ref, a_ref : (TB, 128) f32 (zero-padded inputs)
    w_ref        : (6, 128, 128) f32 packed padded weights
    b_ref        : (6, 128) f32 packed padded biases
    out_ref      : (4, TB, 128) f32  [0]=PS_s [1]=log_PS_s [2]=PA_a [3]=log_PA_a
    """
    b_all = b_ref[...]

    def head(x, base, n_out, out_slot):
        h = x.astype(jnp.float32)
        # two hidden Linear + ReLU layers (padded lanes stay exactly zero)
        for li in range(2):
            h = jnp.dot(h, w_ref[base + li], preferred_element_type=jnp.float32)
            h = jnp.maximum(h + b_all[base + li][None, :], 0.0)
        logits = (jnp.dot(h, w_ref[base + 2], preferred_element_type=jnp.float32)
                  + b_all[base + 2][None, :])
        # keep padded lanes out of the softmax
        lane = jax.lax.broadcasted_iota(jnp.int32, logits.shape, 1)
        logits = jnp.where(lane < n_out, logits, _NEG)
        m = jnp.max(logits, axis=-1, keepdims=True)
        z = logits - m
        denom = jnp.sum(jnp.exp(z), axis=-1, keepdims=True)
        logp = z - jnp.log(denom)      # log_softmax(dim=1)
        p = jnp.exp(logp)              # softmax(dim=1), no divide needed
        out_ref[out_slot] = p
        out_ref[out_slot + 1] = logp

    head(s_ref[...], 0, n_state, 0)
    head(a_ref[...], 3, n_action, 2)


def sa_concept_net_forward(params, s, a, *, n_state_concepts, n_action_concepts):
    batch = s.shape[0]
    # batch tile: whole (padded) batch for small inputs, 256 rows otherwise
    tb = 256 if batch > 256 else _round_up(max(batch, 1), 8)
    batch_pad = _round_up(batch, tb)

    def pad_input(x):
        buf = jnp.zeros((batch_pad, _LANE), jnp.float32)
        return buf.at[:batch, : x.shape[1]].set(x.astype(jnp.float32))

    s_p = pad_input(s)
    a_p = pad_input(a)
    w = params["w"]   # (6, 128, 128)
    bv = params["b"]  # (6, 128)

    kernel = functools.partial(
        _fused_sa_kernel, n_state=n_state_concepts, n_action=n_action_concepts)

    out = pl.pallas_call(
        kernel,
        out_shape=jax.ShapeDtypeStruct((4, batch_pad, _LANE), jnp.float32),
        grid_spec=pltpu.PrefetchScalarGridSpec(
            num_scalar_prefetch=0,
            grid=(batch_pad // tb,),
            in_specs=[
                pl.BlockSpec((tb, _LANE), lambda i: (i, 0)),            # s
                pl.BlockSpec((tb, _LANE), lambda i: (i, 0)),            # a
                pl.BlockSpec((6, _LANE, _LANE), lambda i: (0, 0, 0)),   # weights (resident)
                pl.BlockSpec((6, _LANE), lambda i: (0, 0)),             # biases  (resident)
            ],
            out_specs=pl.BlockSpec((4, tb, _LANE), lambda i: (0, i, 0)),
        ),
        compiler_params=pltpu.CompilerParams(
            dimension_semantics=("parallel",)),
    )(s_p, a_p, w, bv)

    PS_s = out[0, :batch, :n_state_concepts]
    log_PS_s = out[1, :batch, :n_state_concepts]
    PA_a = out[2, :batch, :n_action_concepts]
    log_PA_a = out[3, :batch, :n_action_concepts]
    return PS_s, log_PS_s, PA_a, log_PA_a


# ----------------------------- init helpers ---------------------------------

def _init_linear(key, fan_in, fan_out):
    """PyTorch nn.Linear default init: U(-1/sqrt(fan_in), 1/sqrt(fan_in))."""
    kw, kb = jax.random.split(key)
    bound = 1.0 / jnp.sqrt(jnp.float32(fan_in))
    w = jax.random.uniform(kw, (fan_in, fan_out), jnp.float32, -bound, bound)
    b = jax.random.uniform(kb, (fan_out,), jnp.float32, -bound, bound)
    return w, b


def init_sa_concept_net(key, s_dim, n_state_concepts, a_dim, n_action_concepts,
                        latent_dim=32, init_log_alpha=1.0):
    ks1, ks2, ks3, ka1, ka2, ka3 = jax.random.split(key, 6)
    layers = [
        _init_linear(ks1, s_dim, latent_dim),
        _init_linear(ks2, latent_dim, latent_dim),
        _init_linear(ks3, latent_dim, n_state_concepts),
        _init_linear(ka1, a_dim, latent_dim),
        _init_linear(ka2, latent_dim, latent_dim),
        _init_linear(ka3, latent_dim, n_action_concepts),
    ]
    w_slab = jnp.zeros((6, _LANE, _LANE), jnp.float32)
    b_slab = jnp.zeros((6, _LANE), jnp.float32)
    for i, (w, b) in enumerate(layers):
        w_slab = w_slab.at[i, : w.shape[0], : w.shape[1]].set(w)
        b_slab = b_slab.at[i, : b.shape[0]].set(b)
    return {
        "w": w_slab,
        "b": b_slab,
        "log_alpha": jnp.full((1,), init_log_alpha, jnp.float32),  # unused in fwd
    }


# ----------------------------- reference (for checks) -----------------------

def _ref_head(x, w_slab, b_slab, base, in_dim, latent, n_out):
    w1 = w_slab[base, :in_dim, :latent];      b1 = b_slab[base, :latent]
    w2 = w_slab[base + 1, :latent, :latent];  b2 = b_slab[base + 1, :latent]
    w3 = w_slab[base + 2, :latent, :n_out];   b3 = b_slab[base + 2, :n_out]
    h1 = jax.nn.relu(x @ w1 + b1)
    h2 = jax.nn.relu(h1 @ w2 + b2)
    logits = h2 @ w3 + b3
    return jax.nn.softmax(logits, -1), jax.nn.log_softmax(logits, -1)


if __name__ == "__main__":
    key = jax.random.PRNGKey(0)
    k_param, k_s, k_a = jax.random.split(key, 3)

    batch = 2
    s_dim, a_dim = 16, 8
    n_state_concepts, n_action_concepts = 4, 3
    latent_dim = 32

    params = init_sa_concept_net(
        k_param, s_dim, n_state_concepts, a_dim, n_action_concepts,
        latent_dim=latent_dim, init_log_alpha=1.0)

    s = jax.random.normal(k_s, (batch, s_dim), jnp.float32)
    a = jax.random.normal(k_a, (batch, a_dim), jnp.float32)

    fwd = jax.jit(sa_concept_net_forward,
                  static_argnames=("n_state_concepts", "n_action_concepts"))
    PS_s, log_PS_s, PA_a, log_PA_a = jax.block_until_ready(
        fwd(params, s, a,
            n_state_concepts=n_state_concepts,
            n_action_concepts=n_action_concepts))

    # shape / probability sanity
    assert PS_s.shape == (batch, n_state_concepts)
    assert PA_a.shape == (batch, n_action_concepts)
    assert jnp.allclose(PS_s.sum(-1), 1.0, atol=1e-5)
    assert jnp.allclose(PA_a.sum(-1), 1.0, atol=1e-5)
    assert jnp.allclose(jnp.exp(log_PS_s), PS_s, atol=1e-5)
    assert jnp.allclose(jnp.exp(log_PA_a), PA_a, atol=1e-5)

    # cross-check against a pure-JAX reference of the same packed params
    ref_ps, ref_logps = _ref_head(s, params["w"], params["b"], 0,
                                  s_dim, latent_dim, n_state_concepts)
    ref_pa, ref_logpa = _ref_head(a, params["w"], params["b"], 3,
                                  a_dim, latent_dim, n_action_concepts)
    assert jnp.allclose(PS_s, ref_ps, atol=1e-5)
    assert jnp.allclose(log_PS_s, ref_logps, atol=1e-5)
    assert jnp.allclose(PA_a, ref_pa, atol=1e-5)
    assert jnp.allclose(log_PA_a, ref_logpa, atol=1e-5)

    print("KERNEL_OK")
</pallas_src>

<mosaic_0001>
module attributes {stable_mosaic.version = 11 : i64} {
  func.func @_fused_sa_kernel(%arg0: i32, %arg1: memref<8x128xf32, #tpu.memory_space<vmem>>, %arg2: memref<8x128xf32, #tpu.memory_space<vmem>>, %arg3: memref<6x128x128xf32, #tpu.memory_space<vmem>>, %arg4: memref<6x128xf32, #tpu.memory_space<vmem>>, %arg5: memref<4x8x128xf32, #tpu.memory_space<vmem>>) attributes {dimension_semantics = [#tpu.dimension_semantics<parallel>], iteration_bounds = array<i64: 1>, scalar_prefetch = 0 : i64, scratch_operands = 0 : i64, tpu.core_type = #tpu.core_type<tc>, window_params = [{transform_indices = @transform_0, window_bounds = array<i64: 8, 128>}, {transform_indices = @transform_1, window_bounds = array<i64: 8, 128>}, {pipeline_mode = #tpu.pipeline_mode<synchronous>, transform_indices = @transform_2, window_bounds = array<i64: 6, 128, 128>}, {pipeline_mode = #tpu.pipeline_mode<synchronous>, transform_indices = @transform_3, window_bounds = array<i64: 6, 128>}, {transform_indices = @transform_4, window_bounds = array<i64: 4, 8, 128>}]} {
    %c0 = arith.constant 0 : index
    %c0_0 = arith.constant 0 : index
    %0 = vector.load %arg4[%c0, %c0_0] : memref<6x128xf32, #tpu.memory_space<vmem>>, vector<6x128xf32>
    %c0_1 = arith.constant 0 : index
    %c0_2 = arith.constant 0 : index
    %1 = vector.load %arg1[%c0_1, %c0_2] : memref<8x128xf32, #tpu.memory_space<vmem>>, vector<8x128xf32>
    %c0_3 = arith.constant 0 : index
    %c0_4 = arith.constant 0 : index
    %c0_5 = arith.constant 0 : index
    %2 = vector.load %arg3[%c0_3, %c0_4, %c0_5] : memref<6x128x128xf32, #tpu.memory_space<vmem>>, vector<1x128x128xf32>
    %3 = vector.shape_cast %2 : vector<1x128x128xf32> to vector<128x128xf32>
    %cst = arith.constant dense<0.000000e+00> : vector<8x128xf32>
    %4 = tpu.matmul %1, %3, %cst {dimension_numbers = #tpu.dot_dimension_numbers<[1], [0], [0], [1], [0, 0, 1, 1], [], []>} : vector<8x128xf32>, vector<128x128xf32>, vector<8x128xf32> -> vector<8x128xf32>
    %5 = vector.extract_strided_slice %0 {offsets = [0, 0], sizes = [1, 128], strides = [1, 1]} : vector<6x128xf32> to vector<1x128xf32>
    %6 = vector.shape_cast %5 : vector<1x128xf32> to vector<128xf32>
    %7 = vector.shape_cast %6 : vector<128xf32> to vector<1x128xf32>
    %8 = vector.broadcast %7 : vector<1x128xf32> to vector<8x128xf32>
    %9 = arith.addf %4, %8 : vector<8x128xf32>
    %cst_6 = arith.constant 0.000000e+00 : f32
    %10 = vector.broadcast %cst_6 : f32 to vector<8x128xf32>
    %11 = arith.maximumf %9, %10 : vector<8x128xf32>
    %c1 = arith.constant 1 : index
    %c0_7 = arith.constant 0 : index
    %c0_8 = arith.constant 0 : index
    %12 = vector.load %arg3[%c1, %c0_7, %c0_8] : memref<6x128x128xf32, #tpu.memory_space<vmem>>, vector<1x128x128xf32>
    %13 = vector.shape_cast %12 : vector<1x128x128xf32> to vector<128x128xf32>
    %cst_9 = arith.constant dense<0.000000e+00> : vector<8x128xf32>
    %14 = tpu.matmul %11, %13, %cst_9 {dimension_numbers = #tpu.dot_dimension_numbers<[1], [0], [0], [1], [0, 0, 1, 1], [], []>} : vector<8x128xf32>, vector<128x128xf32>, vector<8x128xf32> -> vector<8x128xf32>
    %15 = vector.extract_strided_slice %0 {offsets = [1, 0], sizes = [1, 128], strides = [1, 1]} : vector<6x128xf32> to vector<1x128xf32>
    %16 = vector.shape_cast %15 : vector<1x128xf32> to vector<128xf32>
    %17 = vector.shape_cast %16 : vector<128xf32> to vector<1x128xf32>
    %18 = vector.broadcast %17 : vector<1x128xf32> to vector<8x128xf32>
    %19 = arith.addf %14, %18 : vector<8x128xf32>
    %cst_10 = arith.constant 0.000000e+00 : f32
    %20 = vector.broadcast %cst_10 : f32 to vector<8x128xf32>
    %21 = arith.maximumf %19, %20 : vector<8x128xf32>
    %c2 = arith.constant 2 : index
    %c0_11 = arith.constant 0 : index
    %c0_12 = arith.constant 0 : index
    %22 = vector.load %arg3[%c2, %c0_11, %c0_12] : memref<6x128x128xf32, #tpu.memory_space<vmem>>, vector<1x128x128xf32>
    %23 = vector.shape_cast %22 : vector<1x128x128xf32> to vector<128x128xf32>
    %cst_13 = arith.constant dense<0.000000e+00> : vector<8x128xf32>
    %24 = tpu.matmul %21, %23, %cst_13 {dimension_numbers = #tpu.dot_dimension_numbers<[1], [0], [0], [1], [0, 0, 1, 1], [], []>} : vector<8x128xf32>, vector<128x128xf32>, vector<8x128xf32> -> vector<8x128xf32>
    %25 = vector.extract_strided_slice %0 {offsets = [2, 0], sizes = [1, 128], strides = [1, 1]} : vector<6x128xf32> to vector<1x128xf32>
    %26 = vector.shape_cast %25 : vector<1x128xf32> to vector<128xf32>
    %27 = vector.shape_cast %26 : vector<128xf32> to vector<1x128xf32>
    %28 = vector.broadcast %27 : vector<1x128xf32> to vector<8x128xf32>
    %29 = arith.addf %24, %28 : vector<8x128xf32>
    %30 = tpu.iota {dimensions = array<i32: 1>} : vector<8x128xi32>
    %c4_i32 = arith.constant 4 : i32
    %31 = vector.broadcast %c4_i32 : i32 to vector<8x128xi32>
    %32 = arith.cmpi slt, %30, %31 : vector<8x128xi32>
    %cst_14 = arith.constant -1.000000e+30 : f32
    %33 = vector.broadcast %cst_14 : f32 to vector<8x128xf32>
    %34 = arith.select %32, %29, %33 : vector<8x128xi1>, vector<8x128xf32>
    %cst_15 = arith.constant dense<0xFF800000> : vector<8xf32>
    %35 = vector.multi_reduction <maximumf>, %34, %cst_15 [1] : vector<8x128xf32> to vector<8xf32>
    %36 = vector.shape_cast %35 : vector<8xf32> to vector<8x1xf32>
    %37 = vector.broadcast %36 : vector<8x1xf32> to vector<8x128xf32>
    %38 = arith.subf %34, %37 : vector<8x128xf32>
    %39 = math.exp %38 : vector<8x128xf32>
    %cst_16 = arith.constant dense<0.000000e+00> : vector<8xf32>
    %40 = vector.multi_reduction <add>, %39, %cst_16 [1] : vector<8x128xf32> to vector<8xf32>
    %41 = vector.shape_cast %40 : vector<8xf32> to vector<8x1xf32>
    %42 = math.log %41 : vector<8x1xf32>
    %43 = vector.broadcast %42 : vector<8x1xf32> to vector<8x128xf32>
    %44 = arith.subf %38, %43 : vector<8x128xf32>
    %45 = math.exp %44 : vector<8x128xf32>
    %c0_17 = arith.constant 0 : index
    %c0_18 = arith.constant 0 : index
    %c0_19 = arith.constant 0 : index
    %46 = vector.load %arg5[%c0_17, %c0_18, %c0_19] : memref<4x8x128xf32, #tpu.memory_space<vmem>>, vector<1x8x128xf32>
    %47 = vector.shape_cast %46 : vector<1x8x128xf32> to vector<8x128xf32>
    %48 = vector.shape_cast %45 : vector<8x128xf32> to vector<1x8x128xf32>
    tpu.vector_store %arg5[%c0_17, %c0_18, %c0_19], %48 {strides = array<i32>} : memref<4x8x128xf32, #tpu.memory_space<vmem>>, vector<1x8x128xf32>,
    %c1_20 = arith.constant 1 : index
    %c0_21 = arith.constant 0 : index
    %c0_22 = arith.constant 0 : index
    %49 = vector.load %arg5[%c1_20, %c0_21, %c0_22] : memref<4x8x128xf32, #tpu.memory_space<vmem>>, vector<1x8x128xf32>
    %50 = vector.shape_cast %49 : vector<1x8x128xf32> to vector<8x128xf32>
    %51 = vector.shape_cast %44 : vector<8x128xf32> to vector<1x8x128xf32>
    tpu.vector_store %arg5[%c1_20, %c0_21, %c0_22], %51 {strides = array<i32>} : memref<4x8x128xf32, #tpu.memory_space<vmem>>, vector<1x8x128xf32>,
    %c0_23 = arith.constant 0 : index
    %c0_24 = arith.constant 0 : index
    %52 = vector.load %arg2[%c0_23, %c0_24] : memref<8x128xf32, #tpu.memory_space<vmem>>, vector<8x128xf32>
    %c3 = arith.constant 3 : index
    %c0_25 = arith.constant 0 : index
    %c0_26 = arith.constant 0 : index
    %53 = vector.load %arg3[%c3, %c0_25, %c0_26] : memref<6x128x128xf32, #tpu.memory_space<vmem>>, vector<1x128x128xf32>
    %54 = vector.shape_cast %53 : vector<1x128x128xf32> to vector<128x128xf32>
    %cst_27 = arith.constant dense<0.000000e+00> : vector<8x128xf32>
    %55 = tpu.matmul %52, %54, %cst_27 {dimension_numbers = #tpu.dot_dimension_numbers<[1], [0], [0], [1], [0, 0, 1, 1], [], []>} : vector<8x128xf32>, vector<128x128xf32>, vector<8x128xf32> -> vector<8x128xf32>
    %56 = vector.extract_strided_slice %0 {offsets = [3, 0], sizes = [1, 128], strides = [1, 1]} : vector<6x128xf32> to vector<1x128xf32>
    %57 = vector.shape_cast %56 : vector<1x128xf32> to vector<128xf32>
    %58 = vector.shape_cast %57 : vector<128xf32> to vector<1x128xf32>
    %59 = vector.broadcast %58 : vector<1x128xf32> to vector<8x128xf32>
    %60 = arith.addf %55, %59 : vector<8x128xf32>
    %cst_28 = arith.constant 0.000000e+00 : f32
    %61 = vector.broadcast %cst_28 : f32 to vector<8x128xf32>
    %62 = arith.maximumf %60, %61 : vector<8x128xf32>
    %c4 = arith.constant 4 : index
    %c0_29 = arith.constant 0 : index
    %c0_30 = arith.constant 0 : index
    %63 = vector.load %arg3[%c4, %c0_29, %c0_30] : memref<6x128x128xf32, #tpu.memory_space<vmem>>, vector<1x128x128xf32>
    %64 = vector.shape_cast %63 : vector<1x128x128xf32> to vector<128x128xf32>
    %cst_31 = arith.constant dense<0.000000e+00> : vector<8x128xf32>
    %65 = tpu.matmul %62, %64, %cst_31 {dimension_numbers = #tpu.dot_dimension_numbers<[1], [0], [0], [1], [0, 0, 1, 1], [], []>} : vector<8x128xf32>, vector<128x128xf32>, vector<8x128xf32> -> vector<8x128xf32>
    %66 = vector.extract_strided_slice %0 {offsets = [4, 0], sizes = [1, 128], strides = [1, 1]} : vector<6x128xf32> to vector<1x128xf32>
    %67 = vector.shape_cast %66 : vector<1x128xf32> to vector<128xf32>
    %68 = vector.shape_cast %67 : vector<128xf32> to vector<1x128xf32>
    %69 = vector.broadcast %68 : vector<1x128xf32> to vector<8x128xf32>
    %70 = arith.addf %65, %69 : vector<8x128xf32>
    %cst_32 = arith.constant 0.000000e+00 : f32
    %71 = vector.broadcast %cst_32 : f32 to vector<8x128xf32>
    %72 = arith.maximumf %70, %71 : vector<8x128xf32>
    %c5 = arith.constant 5 : index
    %c0_33 = arith.constant 0 : index
    %c0_34 = arith.constant 0 : index
    %73 = vector.load %arg3[%c5, %c0_33, %c0_34] : memref<6x128x128xf32, #tpu.memory_space<vmem>>, vector<1x128x128xf32>
    %74 = vector.shape_cast %73 : vector<1x128x128xf32> to vector<128x128xf32>
    %cst_35 = arith.constant dense<0.000000e+00> : vector<8x128xf32>
    %75 = tpu.matmul %72, %74, %cst_35 {dimension_numbers = #tpu.dot_dimension_numbers<[1], [0], [0], [1], [0, 0, 1, 1], [], []>} : vector<8x128xf32>, vector<128x128xf32>, vector<8x128xf32> -> vector<8x128xf32>
    %76 = vector.extract_strided_slice %0 {offsets = [5, 0], sizes = [1, 128], strides = [1, 1]} : vector<6x128xf32> to vector<1x128xf32>
    %77 = vector.shape_cast %76 : vector<1x128xf32> to vector<128xf32>
    %78 = vector.shape_cast %77 : vector<128xf32> to vector<1x128xf32>
    %79 = vector.broadcast %78 : vector<1x128xf32> to vector<8x128xf32>
    %80 = arith.addf %75, %79 : vector<8x128xf32>
    %81 = tpu.iota {dimensions = array<i32: 1>} : vector<8x128xi32>
    %c3_i32 = arith.constant 3 : i32
    %82 = vector.broadcast %c3_i32 : i32 to vector<8x128xi32>
    %83 = arith.cmpi slt, %81, %82 : vector<8x128xi32>
    %cst_36 = arith.constant -1.000000e+30 : f32
    %84 = vector.broadcast %cst_36 : f32 to vector<8x128xf32>
    %85 = arith.select %83, %80, %84 : vector<8x128xi1>, vector<8x128xf32>
    %cst_37 = arith.constant dense<0xFF800000> : vector<8xf32>
    %86 = vector.multi_reduction <maximumf>, %85, %cst_37 [1] : vector<8x128xf32> to vector<8xf32>
    %87 = vector.shape_cast %86 : vector<8xf32> to vector<8x1xf32>
    %88 = vector.broadcast %87 : vector<8x1xf32> to vector<8x128xf32>
    %89 = arith.subf %85, %88 : vector<8x128xf32>
    %90 = math.exp %89 : vector<8x128xf32>
    %cst_38 = arith.constant dense<0.000000e+00> : vector<8xf32>
    %91 = vector.multi_reduction <add>, %90, %cst_38 [1] : vector<8x128xf32> to vector<8xf32>
    %92 = vector.shape_cast %91 : vector<8xf32> to vector<8x1xf32>
    %93 = math.log %92 : vector<8x1xf32>
    %94 = vector.broadcast %93 : vector<8x1xf32> to vector<8x128xf32>
    %95 = arith.subf %89, %94 : vector<8x128xf32>
    %96 = math.exp %95 : vector<8x128xf32>
    %c2_39 = arith.constant 2 : index
    %c0_40 = arith.constant 0 : index
    %c0_41 = arith.constant 0 : index
    %97 = vector.load %arg5[%c2_39, %c0_40, %c0_41] : memref<4x8x128xf32, #tpu.memory_space<vmem>>, vector<1x8x128xf32>
    %98 = vector.shape_cast %97 : vector<1x8x128xf32> to vector<8x128xf32>
    %99 = vector.shape_cast %96 : vector<8x128xf32> to vector<1x8x128xf32>
    tpu.vector_store %arg5[%c2_39, %c0_40, %c0_41], %99 {strides = array<i32>} : memref<4x8x128xf32, #tpu.memory_space<vmem>>, vector<1x8x128xf32>,
    %c3_42 = arith.constant 3 : index
    %c0_43 = arith.constant 0 : index
    %c0_44 = arith.constant 0 : index
    %100 = vector.load %arg5[%c3_42, %c0_43, %c0_44] : memref<4x8x128xf32, #tpu.memory_space<vmem>>, vector<1x8x128xf32>
    %101 = vector.shape_cast %100 : vector<1x8x128xf32> to vector<8x128xf32>
    %102 = vector.shape_cast %95 : vector<8x128xf32> to vector<1x8x128xf32>
    tpu.vector_store %arg5[%c3_42, %c0_43, %c0_44], %102 {strides = array<i32>} : memref<4x8x128xf32, #tpu.memory_space<vmem>>, vector<1x8x128xf32>,
    return
  }
  func.func @transform_0(%arg0: i32) -> (i32, i32) {
    %c0_i32 = arith.constant 0 : i32
    %c0_i32_0 = arith.constant 0 : i32
    return %arg0, %c0_i32 : i32, i32
  }
  func.func @transform_1(%arg0: i32) -> (i32, i32) {
    %c0_i32 = arith.constant 0 : i32
    %c0_i32_0 = arith.constant 0 : i32
    return %arg0, %c0_i32 : i32, i32
  }
  func.func @transform_2(%arg0: i32) -> (i32, i32, i32) {
    %c0_i32 = arith.constant 0 : i32
    %c0_i32_0 = arith.constant 0 : i32
    %c0_i32_1 = arith.constant 0 : i32
    %c0_i32_2 = arith.constant 0 : i32
    return %c0_i32, %c0_i32_0, %c0_i32_1 : i32, i32, i32
  }
  func.func @transform_3(%arg0: i32) -> (i32, i32) {
    %c0_i32 = arith.constant 0 : i32
    %c0_i32_0 = arith.constant 0 : i32
    %c0_i32_1 = arith.constant 0 : i32
    return %c0_i32, %c0_i32_0 : i32, i32
  }
  func.func @transform_4(%arg0: i32) -> (i32, i32, i32) {
    %c0_i32 = arith.constant 0 : i32
    %c0_i32_0 = arith.constant 0 : i32
    %c0_i32_1 = arith.constant 0 : i32
    return %c0_i32, %arg0, %c0_i32_0 : i32, i32, i32
  }
}

</mosaic_0001>

<llo_original>
// kernel: sa_concept_net_forward.1
$region0: #{sa_concept_net_forward.1}
  #allocation0 [shape = 'u32[]', space=smem, size = 0x4, offset = 0x4, fixed_abs, tag = 'smem constant byte address 0x4 - core index']
  #allocation1 [shape = 'u32[144,128]{1,0:T(1,128)}', space=vmem, size = 0x12000, scoped, tag = 'internal scratch']
  %s0 = inlined_call_operand.vmem [shape: f32[8,128], index: 0, kind: input, shape index: {}]
  %s1 = inlined_call_operand.vmem [shape: f32[8,128], index: 1, kind: input, shape index: {}]
  %s2 = inlined_call_operand.hbm [shape: f32[6,128,128], index: 2, kind: input, shape index: {}]
  %s3 = inlined_call_operand.vmem [shape: f32[6,128], index: 3, kind: input, shape index: {}]
  %s4 = inlined_call_operand.vmem [shape: f32[4,8,128], index: 4, kind: output, shape index: {}]
  %s5 = sld [smem:[#allocation0]]
  $region30: #{sa_concept_net_forward.1} parent=0
    _
  %s7 = ssub.s32 1, %s5
  %s8 = scalar_select 0, %s7, %s5
  $region1: #{sa_concept_net_forward.1} parent=0
    #allocation2 [shape = 'u8[393216]{0}', space=vmem, size = 0x60000, scoped, tag = 'input window, operand 2, single buffered']
    #allocation3 [shape = 's32[1]{0}', space=sflag, size = 0x4, scoped, tag = 'scoped memory for sa_concept_net_forward.1']
    %9 = vsyncpa [#allocation3], 0
    // Predicated region
    $region2: #{sa_concept_net_forward.1} parent=1 // pred_check
      _
    $region3: #{sa_concept_net_forward.1} parent=1 // pred_check_branch
      %11 = sbr.rel (0) target = $region5
    $region4: #{sa_concept_net_forward.1} parent=1 // pred_region
      _
    $region5: #{sa_concept_net_forward.1} parent=1 // pred_fallthru
      _
    // Predicated region
    $region6: #{sa_concept_net_forward.1} parent=1 // pred_check
      _
    $region7: #{sa_concept_net_forward.1} parent=1 // pred_check_branch
      %13 = sbr.rel (0) target = $region9
    $region8: #{sa_concept_net_forward.1} parent=1 // pred_region
      _
    $region9: #{sa_concept_net_forward.1} parent=1 // pred_fallthru
      _
    // Predicated region
    $region10: #{sa_concept_net_forward.1} parent=1 // pred_check
      _
    $region11: #{sa_concept_net_forward.1} parent=1 // pred_check_branch
      %15 = sbr.rel (0) target = $region13
    $region12: #{sa_concept_net_forward.1} parent=1 // pred_region
      %s17 = ssub.s32 12288, 12288
      %18 = vsyncadd [#allocation3], %s17
      %s19 = sshll.u32 [#allocation2], 4
      %s20 = int_to_ptr.vmem [resolvable:$true] %s19
      %25 = dma.hbm_to_vmem [thread:$0]  %s2, 12288, %s20, [#allocation3], 128, 128, 8
    $region13: #{sa_concept_net_forward.1} parent=1 // pred_fallthru
      _
    // Predicated region
    $region14: #{sa_concept_net_forward.1} parent=1 // pred_check
      _
    $region15: #{sa_concept_net_forward.1} parent=1 // pred_check_branch
      %27 = sbr.rel (0) target = $region17
    $region16: #{sa_concept_net_forward.1} parent=1 // pred_region
      _
    $region17: #{sa_concept_net_forward.1} parent=1 // pred_fallthru
      _
    // Predicated region
    $region18: #{sa_concept_net_forward.1} parent=1 // pred_check
      _
    $region19: #{sa_concept_net_forward.1} parent=1 // pred_check_branch
      %29 = sbr.rel (0) target = $region21
    $region20: #{sa_concept_net_forward.1} parent=1 // pred_region
      %30 = dma.done [#allocation3], 12288
    $region21: #{sa_concept_net_forward.1} parent=1 // pred_fallthru
      _
    %v31 = vld [vmem:[%s3] sm:$0x3f]
    %v32 = vld [vmem:[%s0] sm:$0xff]
    %v33 = vld [vmem:[#allocation2] sm:$0xff]
    %v34 = vld [vmem:[#allocation2 + $0x8] sm:$0xff]
    %v35 = vld [vmem:[#allocation2 + $0x10] sm:$0xff]
    %v36 = vld [vmem:[#allocation2 + $0x18] sm:$0xff]
    %v37 = vld [vmem:[#allocation2 + $0x20] sm:$0xff]
    %v38 = vld [vmem:[#allocation2 + $0x28] sm:$0xff]
    %v39 = vld [vmem:[#allocation2 + $0x30] sm:$0xff]
    %v40 = vld [vmem:[#allocation2 + $0x38] sm:$0xff]
    %v41 = vld [vmem:[#allocation2 + $0x40] sm:$0xff]
    %v42 = vld [vmem:[#allocation2 + $0x48] sm:$0xff]
    %v43 = vld [vmem:[#allocation2 + $0x50] sm:$0xff]
    %v44 = vld [vmem:[#allocation2 + $0x58] sm:$0xff]
    %v45 = vld [vmem:[#allocation2 + $0x60] sm:$0xff]
    %v46 = vld [vmem:[#allocation2 + $0x68] sm:$0xff]
    %v47 = vld [vmem:[#allocation2 + $0x70] sm:$0xff]
    %v48 = vld [vmem:[#allocation2 + $0x78] sm:$0xff]
    %v49 = vlaneseq
    %v50 = vshrl.u32 %v49, 7
    %v51 = vsub.s32 0, %v50
    %v52 = vrot.slane %v31, %v51
    %53 = vmatprep.subr.mxu0 0.0
    %54 = vmatpush1.msra.mxu0 %v33
    %55 = vmatprep.subr.mxu0 0.0
    %56 = vmatpush1.msra.mxu0 %v34
    %57 = vmatprep.subr.mxu0 0.0
    %58 = vmatpush1.msra.mxu0 %v35
    %59 = vmatprep.subr.mxu0 0.0
    %60 = vmatpush1.msra.mxu0 %v36
    %61 = vmatprep.subr.mxu0 0.0
    %62 = vmatpush1.msra.mxu0 %v37
    %63 = vmatprep.subr.mxu0 0.0
    %64 = vmatpush1.msra.mxu0 %v38
    %65 = vmatprep.subr.mxu0 0.0
    %66 = vmatpush1.msra.mxu0 %v39
    %67 = vmatprep.subr.mxu0 0.0
    %68 = vmatpush1.msra.mxu0 %v40
    %69 = vmatprep.subr.mxu0 0.0
    %70 = vmatpush1.msra.mxu0 %v41
    %71 = vmatprep.subr.mxu0 0.0
    %72 = vmatpush1.msra.mxu0 %v42
    %73 = vmatprep.subr.mxu0 0.0
    %74 = vmatpush1.msra.mxu0 %v43
    %75 = vmatprep.subr.mxu0 0.0
    %76 = vmatpush1.msra.mxu0 %v44
    %77 = vmatprep.subr.mxu0 0.0
    %78 = vmatpush1.msra.mxu0 %v45
    %79 = vmatprep.subr.mxu0 0.0
    %80 = vmatpush1.msra.mxu0 %v46
    %81 = vmatprep.subr.mxu0 0.0
    %82 = vmatpush1.msra.mxu0 %v47
    %83 = vmatprep.subr.mxu0 0.0
    %84 = vmatpush1.msra.mxu0 %v48
    %85 = vmatprep.subr.mxu0 0.0
    %86 = vmatpush1.msra.mxu0 0.0
    %87 = vmatprep.subr.mxu0 0.0
    %88 = vmatpush1.msra.mxu0 0.0
    %89 = vmatprep.subr.mxu0 0.0
    %90 = vmatpush1.msra.mxu0 0.0
    %91 = vmatprep.subr.mxu0 0.0
    %92 = vmatpush1.msra.mxu0 0.0
    %93 = vmatprep.subr.mxu0 0.0
    %94 = vmatpush1.msra.mxu0 0.0
    %95 = vmatprep.subr.mxu0 0.0
    %96 = vmatpush1.msra.mxu0 0.0
    %97 = vmatprep.subr.mxu0 0.0
    %98 = vmatpush1.msra.mxu0 0.0
    %99 = vmatprep.subr.mxu0 0.0
    %100 = vmatpush1.msra.mxu0 0.0
    %101 = vmatprep.subr.mxu0 0.0
    %102 = vmatpush1.msra.mxu0 0.0
    %103 = vmatprep.subr.mxu0 0.0
    %104 = vmatpush1.msra.mxu0 0.0
    %105 = vmatprep.subr.mxu0 0.0
    %106 = vmatpush1.msra.mxu0 0.0
    %107 = vmatprep.subr.mxu0 0.0
    %108 = vmatpush1.msra.mxu0 0.0
    %109 = vmatprep.subr.mxu0 0.0
    %110 = vmatpush1.msra.mxu0 0.0
    %111 = vmatprep.subr.mxu0 0.0
    %112 = vmatpush1.msra.mxu0 0.0
    %113 = vmatprep.subr.mxu0 0.0
    %114 = vmatpush1.msra.mxu0 0.0
    %115 = vmatprep.subr.mxu0 0.0
    %116 = vmatpush1.msra.mxu0 0.0
    %117 = vmatprep.mubr.f32.mxu0 0.0
    %118 = vmatmul.mubr.f32.gmra.mrb[0].mxu0 %v32
    %v119 = vpop.f32.mrb[0].mxu0
    %v120 = vadd.f32 %v52, %v119
    %v121 = vpop.f32.mrb[0].mxu0
    %122 = vdwg.mxu0
    %v123 = vmax.f32 %v120, 0.0
    %s124 = scalar_lea.vmem [#allocation2], 128
    %v125 = vld [vmem:[%s124] sm:$0xff]
    %v126 = vld [vmem:[%s124 + $0x8] sm:$0xff]
    %v127 = vld [vmem:[%s124 + $0x10] sm:$0xff]
    %v128 = vld [vmem:[%s124 + $0x18] sm:$0xff]
    %v129 = vld [vmem:[%s124 + $0x20] sm:$0xff]
    %v130 = vld [vmem:[%s124 + $0x28] sm:$0xff]
    %v131 = vld [vmem:[%s124 + $0x30] sm:$0xff]
    %v132 = vld [vmem:[%s124 + $0x38] sm:$0xff]
    %v133 = vld [vmem:[%s124 + $0x40] sm:$0xff]
    %v134 = vld [vmem:[%s124 + $0x48] sm:$0xff]
    %v135 = vld [vmem:[%s124 + $0x50] sm:$0xff]
    %v136 = vld [vmem:[%s124 + $0x58] sm:$0xff]
    %v137 = vld [vmem:[%s124 + $0x60] sm:$0xff]
    %v138 = vld [vmem:[%s124 + $0x68] sm:$0xff]
    %v139 = vld [vmem:[%s124 + $0x70] sm:$0xff]
    %v140 = vld [vmem:[%s124 + $0x78] sm:$0xff]
    %v141 = vlaneseq
    %v142 = vshrl.u32 %v141, 7
    %v143 = vsub.s32 1, %v142
    %v144 = vrot.slane %v31, %v143
    %145 = vmatprep.subr.mxu0 0.0
    %146 = vmatpush1.msra.mxu0 %v125
    %147 = vmatprep.subr.mxu0 0.0
    %148 = vmatpush1.msra.mxu0 %v126
    %149 = vmatprep.subr.mxu0 0.0
    %150 = vmatpush1.msra.mxu0 %v127
    %151 = vmatprep.subr.mxu0 0.0
    %152 = vmatpush1.msra.mxu0 %v128
    %153 = vmatprep.subr.mxu0 0.0
    %154 = vmatpush1.msra.mxu0 %v129
    %155 = vmatprep.subr.mxu0 0.0
    %156 = vmatpush1.msra.mxu0 %v130
    %157 = vmatprep.subr.mxu0 0.0
    %158 = vmatpush1.msra.mxu0 %v131
    %159 = vmatprep.subr.mxu0 0.0
    %160 = vmatpush1.msra.mxu0 %v132
    %161 = vmatprep.subr.mxu0 0.0
    %162 = vmatpush1.msra.mxu0 %v133
    %163 = vmatprep.subr.mxu0 0.0
    %164 = vmatpush1.msra.mxu0 %v134
    %165 = vmatprep.subr.mxu0 0.0
    %166 = vmatpush1.msra.mxu0 %v135
    %167 = vmatprep.subr.mxu0 0.0
    %168 = vmatpush1.msra.mxu0 %v136
    %169 = vmatprep.subr.mxu0 0.0
    %170 = vmatpush1.msra.mxu0 %v137
    %171 = vmatprep.subr.mxu0 0.0
    %172 = vmatpush1.msra.mxu0 %v138
    %173 = vmatprep.subr.mxu0 0.0
    %174 = vmatpush1.msra.mxu0 %v139
    %175 = vmatprep.subr.mxu0 0.0
    %176 = vmatpush1.msra.mxu0 %v140
    %177 = vmatprep.subr.mxu0 0.0
    %178 = vmatpush1.msra.mxu0 0.0
    %179 = vmatprep.subr.mxu0 0.0
    %180 = vmatpush1.msra.mxu0 0.0
    %181 = vmatprep.subr.mxu0 0.0
    %182 = vmatpush1.msra.mxu0 0.0
    %183 = vmatprep.subr.mxu0 0.0
    %184 = vmatpush1.msra.mxu0 0.0
    %185 = vmatprep.subr.mxu0 0.0
    %186 = vmatpush1.msra.mxu0 0.0
    %187 = vmatprep.subr.mxu0 0.0
    %188 = vmatpush1.msra.mxu0 0.0
    %189 = vmatprep.subr.mxu0 0.0
    %190 = vmatpush1.msra.mxu0 0.0
    %191 = vmatprep.subr.mxu0 0.0
    %192 = vmatpush1.msra.mxu0 0.0
    %193 = vmatprep.subr.mxu0 0.0
    %194 = vmatpush1.msra.mxu0 0.0
    %195 = vmatprep.subr.mxu0 0.0
    %196 = vmatpush1.msra.mxu0 0.0
    %197 = vmatprep.subr.mxu0 0.0
    %198 = vmatpush1.msra.mxu0 0.0
    %199 = vmatprep.subr.mxu0 0.0
    %200 = vmatpush1.msra.mxu0 0.0
    %201 = vmatprep.subr.mxu0 0.0
    %202 = vmatpush1.msra.mxu0 0.0
    %203 = vmatprep.subr.mxu0 0.0
    %204 = vmatpush1.msra.mxu0 0.0
    %205 = vmatprep.subr.mxu0 0.0
    %206 = vmatpush1.msra.mxu0 0.0
    %207 = vmatprep.subr.mxu0 0.0
    %208 = vmatpush1.msra.mxu0 0.0
    %209 = vmatprep.mubr.f32.mxu0 0.0
    %210 = vmatmul.mubr.f32.gmra.mrb[0].mxu0 %v123
    %v211 = vpop.f32.mrb[0].mxu0
    %v212 = vadd.f32 %v144, %v211
    %v213 = vpop.f32.mrb[0].mxu0
    %214 = vdwg.mxu0
    %v215 = vmax.f32 %v212, 0.0
    %s216 = scalar_lea.vmem [#allocation2], 256
    %v217 = vld [vmem:[%s216] sm:$0xff]
    %v218 = vld [vmem:[%s216 + $0x8] sm:$0xff]
    %v219 = vld [vmem:[%s216 + $0x10] sm:$0xff]
    %v220 = vld [vmem:[%s216 + $0x18] sm:$0xff]
    %v221 = vld [vmem:[%s216 + $0x20] sm:$0xff]
    %v222 = vld [vmem:[%s216 + $0x28] sm:$0xff]
    %v223 = vld [vmem:[%s216 + $0x30] sm:$0xff]
    %v224 = vld [vmem:[%s216 + $0x38] sm:$0xff]
    %v225 = vld [vmem:[%s216 + $0x40] sm:$0xff]
    %v226 = vld [vmem:[%s216 + $0x48] sm:$0xff]
    %v227 = vld [vmem:[%s216 + $0x50] sm:$0xff]
    %v228 = vld [vmem:[%s216 + $0x58] sm:$0xff]
    %v229 = vld [vmem:[%s216 + $0x60] sm:$0xff]
    %v230 = vld [vmem:[%s216 + $0x68] sm:$0xff]
    %v231 = vld [vmem:[%s216 + $0x70] sm:$0xff]
    %v232 = vld [vmem:[%s216 + $0x78] sm:$0xff]
    %v233 = vlaneseq
    %v234 = vshrl.u32 %v233, 7
    %v235 = vsub.s32 2, %v234
    %v236 = vrot.slane %v31, %v235
    %237 = vmatprep.subr.mxu0 0.0
    %238 = vmatpush1.msra.mxu0 %v217
    %239 = vmatprep.subr.mxu0 0.0
    %240 = vmatpush1.msra.mxu0 %v218
    %241 = vmatprep.subr.mxu0 0.0
    %242 = vmatpush1.msra.mxu0 %v219
    %243 = vmatprep.subr.mxu0 0.0
    %244 = vmatpush1.msra.mxu0 %v220
    %245 = vmatprep.subr.mxu0 0.0
    %246 = vmatpush1.msra.mxu0 %v221
    %247 = vmatprep.subr.mxu0 0.0
    %248 = vmatpush1.msra.mxu0 %v222
    %249 = vmatprep.subr.mxu0 0.0
    %250 = vmatpush1.msra.mxu0 %v223
    %251 = vmatprep.subr.mxu0 0.0
    %252 = vmatpush1.msra.mxu0 %v224
    %253 = vmatprep.subr.mxu0 0.0
    %254 = vmatpush1.msra.mxu0 %v225
    %255 = vmatprep.subr.mxu0 0.0
    %256 = vmatpush1.msra.mxu0 %v226
    %257 = vmatprep.subr.mxu0 0.0
    %258 = vmatpush1.msra.mxu0 %v227
    %259 = vmatprep.subr.mxu0 0.0
    %260 = vmatpush1.msra.mxu0 %v228
    %261 = vmatprep.subr.mxu0 0.0
    %262 = vmatpush1.msra.mxu0 %v229
    %263 = vmatprep.subr.mxu0 0.0
    %264 = vmatpush1.msra.mxu0 %v230
    %265 = vmatprep.subr.mxu0 0.0
    %266 = vmatpush1.msra.mxu0 %v231
    %267 = vmatprep.subr.mxu0 0.0
    %268 = vmatpush1.msra.mxu0 %v232
    %269 = vmatprep.subr.mxu0 0.0
    %270 = vmatpush1.msra.mxu0 0.0
    %271 = vmatprep.subr.mxu0 0.0
    %272 = vmatpush1.msra.mxu0 0.0
    %273 = vmatprep.subr.mxu0 0.0
    %274 = vmatpush1.msra.mxu0 0.0
    %275 = vmatprep.subr.mxu0 0.0
    %276 = vmatpush1.msra.mxu0 0.0
    %277 = vmatprep.subr.mxu0 0.0
    %278 = vmatpush1.msra.mxu0 0.0
    %279 = vmatprep.subr.mxu0 0.0
    %280 = vmatpush1.msra.mxu0 0.0
    %281 = vmatprep.subr.mxu0 0.0
    %282 = vmatpush1.msra.mxu0 0.0
    %283 = vmatprep.subr.mxu0 0.0
    %284 = vmatpush1.msra.mxu0 0.0
    %285 = vmatprep.subr.mxu0 0.0
    %286 = vmatpush1.msra.mxu0 0.0
    %287 = vmatprep.subr.mxu0 0.0
    %288 = vmatpush1.msra.mxu0 0.0
    %289 = vmatprep.subr.mxu0 0.0
    %290 = vmatpush1.msra.mxu0 0.0
    %291 = vmatprep.subr.mxu0 0.0
    %292 = vmatpush1.msra.mxu0 0.0
    %293 = vmatprep.subr.mxu0 0.0
    %294 = vmatpush1.msra.mxu0 0.0
    %295 = vmatprep.subr.mxu0 0.0
    %296 = vmatpush1.msra.mxu0 0.0
    %297 = vmatprep.subr.mxu0 0.0
    %298 = vmatpush1.msra.mxu0 0.0
    %299 = vmatprep.subr.mxu0 0.0
    %300 = vmatpush1.msra.mxu0 0.0
    %301 = vmatprep.mubr.f32.mxu0 0.0
    %302 = vmatmul.mubr.f32.gmra.mrb[0].mxu0 %v215
    %v303 = vpop.f32.mrb[0].mxu0
    %v304 = vadd.f32 %v236, %v303
    %v305 = vpop.f32.mrb[0].mxu0
    %306 = vdwg.mxu0
    %v307 = vlaneseq
    %v308 = vand.u32 %v307, 127
    %vm309 = vcmp.lt.s32.totalorder %v308, 4
    %v310 = vsel %vm309, %v304, -1e+30
    %311 = vmax.xlane.f32.xlu0 %v310
    %v312 = vpop.xlane.xlu0 %311
    %v313 = vsub.f32 %v310, %v312
    %v314 = vmul.f32 %v313, 1.442695
    %v315 = vpow.pop %v314
    %316 = vadd.xlane.f32.xlu0 %v315
    %v317 = vpop.xlane.xlu0 %316
    %v318 = vlog2.pop %v317
    %v319 = vmul.f32 %v318, 0.6931472
    %v320 = vsub.f32 %v313, %v319
    %v321 = vmul.f32 %v320, 1.442695
    %v322 = vpow.pop %v321
    %323 = vst [vmem:[%s4] sm:$0xff] %v322
    %s324 = scalar_lea.vmem %s4, 8
    %325 = vst [vmem:[%s324] sm:$0xff] %v320
    %v326 = vld [vmem:[%s1] sm:$0xff]
    %s327 = scalar_lea.vmem [#allocation2], 384
    %v328 = vld [vmem:[%s327] sm:$0xff]
    %v329 = vld [vmem:[%s327 + $0x8] sm:$0xff]
    %v330 = vld [vmem:[%s327 + $0x10] sm:$0xff]
    %v331 = vld [vmem:[%s327 + $0x18] sm:$0xff]
    %v332 = vld [vmem:[%s327 + $0x20] sm:$0xff]
    %v333 = vld [vmem:[%s327 + $0x28] sm:$0xff]
    %v334 = vld [vmem:[%s327 + $0x30] sm:$0xff]
    %v335 = vld [vmem:[%s327 + $0x38] sm:$0xff]
    %v336 = vld [vmem:[%s327 + $0x40] sm:$0xff]
    %v337 = vld [vmem:[%s327 + $0x48] sm:$0xff]
    %v338 = vld [vmem:[%s327 + $0x50] sm:$0xff]
    %v339 = vld [vmem:[%s327 + $0x58] sm:$0xff]
    %v340 = vld [vmem:[%s327 + $0x60] sm:$0xff]
    %v341 = vld [vmem:[%s327 + $0x68] sm:$0xff]
    %v342 = vld [vmem:[%s327 + $0x70] sm:$0xff]
    %v343 = vld [vmem:[%s327 + $0x78] sm:$0xff]
    %v344 = vlaneseq
    %v345 = vshrl.u32 %v344, 7
    %v346 = vsub.s32 3, %v345
    %v347 = vrot.slane %v31, %v346
    %348 = vmatprep.subr.mxu0 0.0
    %349 = vmatpush1.msra.mxu0 %v328
    %350 = vmatprep.subr.mxu0 0.0
    %351 = vmatpush1.msra.mxu0 %v329
    %352 = vmatprep.subr.mxu0 0.0
    %353 = vmatpush1.msra.mxu0 %v330
    %354 = vmatprep.subr.mxu0 0.0
    %355 = vmatpush1.msra.mxu0 %v331
    %356 = vmatprep.subr.mxu0 0.0
    %357 = vmatpush1.msra.mxu0 %v332
    %358 = vmatprep.subr.mxu0 0.0
    %359 = vmatpush1.msra.mxu0 %v333
    %360 = vmatprep.subr.mxu0 0.0
    %361 = vmatpush1.msra.mxu0 %v334
    %362 = vmatprep.subr.mxu0 0.0
    %363 = vmatpush1.msra.mxu0 %v335
    %364 = vmatprep.subr.mxu0 0.0
    %365 = vmatpush1.msra.mxu0 %v336
    %366 = vmatprep.subr.mxu0 0.0
    %367 = vmatpush1.msra.mxu0 %v337
    %368 = vmatprep.subr.mxu0 0.0
    %369 = vmatpush1.msra.mxu0 %v338
    %370 = vmatprep.subr.mxu0 0.0
    %371 = vmatpush1.msra.mxu0 %v339
    %372 = vmatprep.subr.mxu0 0.0
    %373 = vmatpush1.msra.mxu0 %v340
    %374 = vmatprep.subr.mxu0 0.0
    %375 = vmatpush1.msra.mxu0 %v341
    %376 = vmatprep.subr.mxu0 0.0
    %377 = vmatpush1.msra.mxu0 %v342
    %378 = vmatprep.subr.mxu0 0.0
    %379 = vmatpush1.msra.mxu0 %v343
    %380 = vmatprep.subr.mxu0 0.0
    %381 = vmatpush1.msra.mxu0 0.0
    %382 = vmatprep.subr.mxu0 0.0
    %383 = vmatpush1.msra.mxu0 0.0
    %384 = vmatprep.subr.mxu0 0.0
    %385 = vmatpush1.msra.mxu0 0.0
    %386 = vmatprep.subr.mxu0 0.0
    %387 = vmatpush1.msra.mxu0 0.0
    %388 = vmatprep.subr.mxu0 0.0
    %389 = vmatpush1.msra.mxu0 0.0
    %390 = vmatprep.subr.mxu0 0.0
    %391 = vmatpush1.msra.mxu0 0.0
    %392 = vmatprep.subr.mxu0 0.0
    %393 = vmatpush1.msra.mxu0 0.0
    %394 = vmatprep.subr.mxu0 0.0
    %395 = vmatpush1.msra.mxu0 0.0
    %396 = vmatprep.subr.mxu0 0.0
    %397 = vmatpush1.msra.mxu0 0.0
    %398 = vmatprep.subr.mxu0 0.0
    %399 = vmatpush1.msra.mxu0 0.0
    %400 = vmatprep.subr.mxu0 0.0
    %401 = vmatpush1.msra.mxu0 0.0
    %402 = vmatprep.subr.mxu0 0.0
    %403 = vmatpush1.msra.mxu0 0.0
    %404 = vmatprep.subr.mxu0 0.0
    %405 = vmatpush1.msra.mxu0 0.0
    %406 = vmatprep.subr.mxu0 0.0
    %407 = vmatpush1.msra.mxu0 0.0
    %408 = vmatprep.subr.mxu0 0.0
    %409 = vmatpush1.msra.mxu0 0.0
    %410 = vmatprep.subr.mxu0 0.0
    %411 = vmatpush1.msra.mxu0 0.0
    %412 = vmatprep.mubr.f32.mxu0 0.0
    %413 = vmatmul.mubr.f32.gmra.mrb[0].mxu0 %v326
    %v414 = vpop.f32.mrb[0].mxu0
    %v415 = vadd.f32 %v347, %v414
    %v416 = vpop.f32.mrb[0].mxu0
    %417 = vdwg.mxu0
    %v418 = vmax.f32 %v415, 0.0
    %s419 = scalar_lea.vmem [#allocation2], 512
    %v420 = vld [vmem:[%s419] sm:$0xff]
    %v421 = vld [vmem:[%s419 + $0x8] sm:$0xff]
    %v422 = vld [vmem:[%s419 + $0x10] sm:$0xff]
    %v423 = vld [vmem:[%s419 + $0x18] sm:$0xff]
    %v424 = vld [vmem:[%s419 + $0x20] sm:$0xff]
    %v425 = vld [vmem:[%s419 + $0x28] sm:$0xff]
    %v426 = vld [vmem:[%s419 + $0x30] sm:$0xff]
    %v427 = vld [vmem:[%s419 + $0x38] sm:$0xff]
    %v428 = vld [vmem:[%s419 + $0x40] sm:$0xff]
    %v429 = vld [vmem:[%s419 + $0x48] sm:$0xff]
    %v430 = vld [vmem:[%s419 + $0x50] sm:$0xff]
    %v431 = vld [vmem:[%s419 + $0x58] sm:$0xff]
    %v432 = vld [vmem:[%s419 + $0x60] sm:$0xff]
    %v433 = vld [vmem:[%s419 + $0x68] sm:$0xff]
    %v434 = vld [vmem:[%s419 + $0x70] sm:$0xff]
    %v435 = vld [vmem:[%s419 + $0x78] sm:$0xff]
    %v436 = vlaneseq
    %v437 = vshrl.u32 %v436, 7
    %v438 = vsub.s32 4, %v437
    %v439 = vrot.slane %v31, %v438
    %440 = vmatprep.subr.mxu0 0.0
    %441 = vmatpush1.msra.mxu0 %v420
    %442 = vmatprep.subr.mxu0 0.0
    %443 = vmatpush1.msra.mxu0 %v421
    %444 = vmatprep.subr.mxu0 0.0
    %445 = vmatpush1.msra.mxu0 %v422
    %446 = vmatprep.subr.mxu0 0.0
    %447 = vmatpush1.msra.mxu0 %v423
    %448 = vmatprep.subr.mxu0 0.0
    %449 = vmatpush1.msra.mxu0 %v424
    %450 = vmatprep.subr.mxu0 0.0
    %451 = vmatpush1.msra.mxu0 %v425
    %452 = vmatprep.subr.mxu0 0.0
    %453 = vmatpush1.msra.mxu0 %v426
    %454 = vmatprep.subr.mxu0 0.0
    %455 = vmatpush1.msra.mxu0 %v427
    %456 = vmatprep.subr.mxu0 0.0
    %457 = vmatpush1.msra.mxu0 %v428
    %458 = vmatprep.subr.mxu0 0.0
    %459 = vmatpush1.msra.mxu0 %v429
    %460 = vmatprep.subr.mxu0 0.0
    %461 = vmatpush1.msra.mxu0 %v430
    %462 = vmatprep.subr.mxu0 0.0
    %463 = vmatpush1.msra.mxu0 %v431
    %464 = vmatprep.subr.mxu0 0.0
    %465 = vmatpush1.msra.mxu0 %v432
    %466 = vmatprep.subr.mxu0 0.0
    %467 = vmatpush1.msra.mxu0 %v433
    %468 = vmatprep.subr.mxu0 0.0
    %469 = vmatpush1.msra.mxu0 %v434
    %470 = vmatprep.subr.mxu0 0.0
    %471 = vmatpush1.msra.mxu0 %v435
    %472 = vmatprep.subr.mxu0 0.0
    %473 = vmatpush1.msra.mxu0 0.0
    %474 = vmatprep.subr.mxu0 0.0
    %475 = vmatpush1.msra.mxu0 0.0
    %476 = vmatprep.subr.mxu0 0.0
    %477 = vmatpush1.msra.mxu0 0.0
    %478 = vmatprep.subr.mxu0 0.0
    %479 = vmatpush1.msra.mxu0 0.0
    %480 = vmatprep.subr.mxu0 0.0
    %481 = vmatpush1.msra.mxu0 0.0
    %482 = vmatprep.subr.mxu0 0.0
    %483 = vmatpush1.msra.mxu0 0.0
    %484 = vmatprep.subr.mxu0 0.0
    %485 = vmatpush1.msra.mxu0 0.0
    %486 = vmatprep.subr.mxu0 0.0
    %487 = vmatpush1.msra.mxu0 0.0
    %488 = vmatprep.subr.mxu0 0.0
    %489 = vmatpush1.msra.mxu0 0.0
    %490 = vmatprep.subr.mxu0 0.0
    %491 = vmatpush1.msra.mxu0 0.0
    %492 = vmatprep.subr.mxu0 0.0
    %493 = vmatpush1.msra.mxu0 0.0
    %494 = vmatprep.subr.mxu0 0.0
    %495 = vmatpush1.msra.mxu0 0.0
    %496 = vmatprep.subr.mxu0 0.0
    %497 = vmatpush1.msra.mxu0 0.0
    %498 = vmatprep.subr.mxu0 0.0
    %499 = vmatpush1.msra.mxu0 0.0
    %500 = vmatprep.subr.mxu0 0.0
    %501 = vmatpush1.msra.mxu0 0.0
    %502 = vmatprep.subr.mxu0 0.0
    %503 = vmatpush1.msra.mxu0 0.0
    %504 = vmatprep.mubr.f32.mxu0 0.0
    %505 = vmatmul.mubr.f32.gmra.mrb[0].mxu0 %v418
    %v506 = vpop.f32.mrb[0].mxu0
    %v507 = vadd.f32 %v439, %v506
    %v508 = vpop.f32.mrb[0].mxu0
    %509 = vdwg.mxu0
    %v510 = vmax.f32 %v507, 0.0
    %s511 = scalar_lea.vmem [#allocation2], 640
    %v512 = vld [vmem:[%s511] sm:$0xff]
    %v513 = vld [vmem:[%s511 + $0x8] sm:$0xff]
    %v514 = vld [vmem:[%s511 + $0x10] sm:$0xff]
    %v515 = vld [vmem:[%s511 + $0x18] sm:$0xff]
    %v516 = vld [vmem:[%s511 + $0x20] sm:$0xff]
    %v517 = vld [vmem:[%s511 + $0x28] sm:$0xff]
    %v518 = vld [vmem:[%s511 + $0x30] sm:$0xff]
    %v519 = vld [vmem:[%s511 + $0x38] sm:$0xff]
    %v520 = vld [vmem:[%s511 + $0x40] sm:$0xff]
    %v521 = vld [vmem:[%s511 + $0x48] sm:$0xff]
    %v522 = vld [vmem:[%s511 + $0x50] sm:$0xff]
    %v523 = vld [vmem:[%s511 + $0x58] sm:$0xff]
    %v524 = vld [vmem:[%s511 + $0x60] sm:$0xff]
    %v525 = vld [vmem:[%s511 + $0x68] sm:$0xff]
    %v526 = vld [vmem:[%s511 + $0x70] sm:$0xff]
    %v527 = vld [vmem:[%s511 + $0x78] sm:$0xff]
    %v528 = vlaneseq
    %v529 = vshrl.u32 %v528, 7
    %v530 = vsub.s32 5, %v529
    %v531 = vrot.slane %v31, %v530
    %532 = vmatprep.subr.mxu0 0.0
    %533 = vmatpush1.msra.mxu0 %v512
    %534 = vmatprep.subr.mxu0 0.0
    %535 = vmatpush1.msra.mxu0 %v513
    %536 = vmatprep.subr.mxu0 0.0
    %537 = vmatpush1.msra.mxu0 %v514
    %538 = vmatprep.subr.mxu0 0.0
    %539 = vmatpush1.msra.mxu0 %v515
    %540 = vmatprep.subr.mxu0 0.0
    %541 = vmatpush1.msra.mxu0 %v516
    %542 = vmatprep.subr.mxu0 0.0
    %543 = vmatpush1.msra.mxu0 %v517
    %544 = vmatprep.subr.mxu0 0.0
    %545 = vmatpush1.msra.mxu0 %v518
    %546 = vmatprep.subr.mxu0 0.0
    %547 = vmatpush1.msra.mxu0 %v519
    %548 = vmatprep.subr.mxu0 0.0
    %549 = vmatpush1.msra.mxu0 %v520
    %550 = vmatprep.subr.mxu0 0.0
    %551 = vmatpush1.msra.mxu0 %v521
    %552 = vmatprep.subr.mxu0 0.0
    %553 = vmatpush1.msra.mxu0 %v522
    %554 = vmatprep.subr.mxu0 0.0
    %555 = vmatpush1.msra.mxu0 %v523
    %556 = vmatprep.subr.mxu0 0.0
    %557 = vmatpush1.msra.mxu0 %v524
    %558 = vmatprep.subr.mxu0 0.0
    %559 = vmatpush1.msra.mxu0 %v525
    %560 = vmatprep.subr.mxu0 0.0
    %561 = vmatpush1.msra.mxu0 %v526
    %562 = vmatprep.subr.mxu0 0.0
    %563 = vmatpush1.msra.mxu0 %v527
    %564 = vmatprep.subr.mxu0 0.0
    %565 = vmatpush1.msra.mxu0 0.0
    %566 = vmatprep.subr.mxu0 0.0
    %567 = vmatpush1.msra.mxu0 0.0
    %568 = vmatprep.subr.mxu0 0.0
    %569 = vmatpush1.msra.mxu0 0.0
    %570 = vmatprep.subr.mxu0 0.0
    %571 = vmatpush1.msra.mxu0 0.0
    %572 = vmatprep.subr.mxu0 0.0
    %573 = vmatpush1.msra.mxu0 0.0
    %574 = vmatprep.subr.mxu0 0.0
    %575 = vmatpush1.msra.mxu0 0.0
    %576 = vmatprep.subr.mxu0 0.0
    %577 = vmatpush1.msra.mxu0 0.0
    %578 = vmatprep.subr.mxu0 0.0
    %579 = vmatpush1.msra.mxu0 0.0
    %580 = vmatprep.subr.mxu0 0.0
    %581 = vmatpush1.msra.mxu0 0.0
    %582 = vmatprep.subr.mxu0 0.0
    %583 = vmatpush1.msra.mxu0 0.0
    %584 = vmatprep.subr.mxu0 0.0
    %585 = vmatpush1.msra.mxu0 0.0
    %586 = vmatprep.subr.mxu0 0.0
    %587 = vmatpush1.msra.mxu0 0.0
    %588 = vmatprep.subr.mxu0 0.0
    %589 = vmatpush1.msra.mxu0 0.0
    %590 = vmatprep.subr.mxu0 0.0
    %591 = vmatpush1.msra.mxu0 0.0
    %592 = vmatprep.subr.mxu0 0.0
    %593 = vmatpush1.msra.mxu0 0.0
    %594 = vmatprep.subr.mxu0 0.0
    %595 = vmatpush1.msra.mxu0 0.0
    %596 = vmatprep.mubr.f32.mxu0 0.0
    %597 = vmatmul.mubr.f32.gmra.mrb[0].mxu0 %v510
    %v598 = vpop.f32.mrb[0].mxu0
    %v599 = vadd.f32 %v531, %v598
    %v600 = vpop.f32.mrb[0].mxu0
    %601 = vdwg.mxu0
    %vm602 = vcmp.lt.s32.totalorder %v308, 3
    %v603 = vsel %vm602, %v599, -1e+30
    %604 = vmax.xlane.f32.xlu0 %v603
    %v605 = vpop.xlane.xlu0 %604
    %v606 = vsub.f32 %v603, %v605
    %v607 = vmul.f32 %v606, 1.442695
    %v608 = vpow.pop %v607
    %609 = vadd.xlane.f32.xlu0 %v608
    %v610 = vpop.xlane.xlu0 %609
    %v611 = vlog2.pop %v610
    %v612 = vmul.f32 %v611, 0.6931472
    %v613 = vsub.f32 %v606, %v612
    %v614 = vmul.f32 %v613, 1.442695
    %v615 = vpow.pop %v614
    %s616 = scalar_lea.vmem %s4, 16
    %617 = vst [vmem:[%s616] sm:$0xff] %v615
    %s618 = scalar_lea.vmem %s4, 24
    %619 = vst [vmem:[%s618] sm:$0xff] %v613
    // Predicated region
    $region22: #{sa_concept_net_forward.1} parent=1 // pred_check
      _
    $region23: #{sa_concept_net_forward.1} parent=1 // pred_check_branch
      %621 = sbr.rel (0) target = $region25
    $region24: #{sa_concept_net_forward.1} parent=1 // pred_region
      _
    $region25: #{sa_concept_net_forward.1} parent=1 // pred_fallthru
      _
    // Predicated region
    $region26: #{sa_concept_net_forward.1} parent=1 // pred_check
      _
    $region27: #{sa_concept_net_forward.1} parent=1 // pred_check_branch
      %623 = sbr.rel (0) target = $region29
    $region28: #{sa_concept_net_forward.1} parent=1 // pred_region
      _
    $region29: #{sa_concept_net_forward.1} parent=1 // pred_fallthru
      _
    %624 = vsyncpa [#allocation3], 1

</llo_original>
